<compile_context>
chip_gen: v7x
topology: tpu7x:2x2x1
jax: 0.10.0
libtpu: 0.0.40
codegen_flags: <defaults>
</compile_context>

<pallas_src>
import math

import jax
import jax.numpy as jnp
import numpy as np
from jax.experimental import pallas as pl
from jax.experimental.pallas import tpu as pltpu


def _round_up(v: int, m: int) -> int:
    return ((v + m - 1) // m) * m


def make_tsdecoder_kernel(indim: int, finaldim: int, timestep: int, fd_pad: int):
    """Returns the Pallas kernel body (closure over static shapes).

    Packed operand layout (all f32):
      w_ref : (fd_pad + d_pad, 4d)   rows [0:finaldim]        = W0  = [w_lin | w_lin@w_hh]
                                     rows [fd_pad:fd_pad+d]   = W_step = [w_ih_rz+w_hh_rz | w_ih_n | w_hh_n]
      b_ref : (2, 4d)                row 0 = B0   (step-0 biases, pre-folded)
                                     row 1 = B_step = [b_ih_rz+b_hh_rz | b_ih_n | b_hh_n]
    """
    d = indim
    GROUP = 4  # 4 * d == 128 lanes at d == 32 -> unmasked vst per group

    def sigmoid1(x):
        # Single-EUP sigmoid: sigmoid(x) == 0.5 * tanh(0.5 * x) + 0.5
        return 0.5 * jnp.tanh(0.5 * x) + 0.5

    def kernel(x_ref, w_ref, b_ref, out_ref):
        # Loop-invariant operands, loaded/sliced once (Mosaic hoists these; the
        # W_step value stays the same RHS for every step's matmul).
        b0 = b_ref[0:1, :]                          # (1, 4d)
        b_step = b_ref[1:2, :]                      # (1, 4d)
        b_ih_n = b_step[:, 2 * d:3 * d]             # (1, d)  -- step-0 n-gate bias
        w0 = w_ref[0:finaldim, :]                   # (finaldim, 4d)
        w_step = w_ref[fd_pad:fd_pad + d, :]        # (d, 4d)

        # ---- step 0 (peeled): next == 0.  One fused matmul gives
        #      F = [h0 | pre_rz0 (+b_rz folded) | gh_n0 (+b_hh_n folded)].
        f = jnp.dot(x_ref[...], w0, preferred_element_type=jnp.float32) + b0
        h = f[:, :d]
        rz = sigmoid1(f[:, d:3 * d])
        r = rz[:, :d]
        z = rz[:, d:]
        n = jnp.tanh(b_ih_n + r * f[:, 3 * d:])
        h = n + z * (h - n)

        # ---- steps 1..ts-1: next == h, single fused (bm, d) @ (d, 4d) matmul.
        # Note: for very large timestep this unrolled loop should become a
        # lax.fori_loop(unroll=4); at decoder-sized ts the unroll is fine.
        outs = [h]
        base = 0
        for _ in range(1, timestep):
            g = jnp.dot(h, w_step, preferred_element_type=jnp.float32) + b_step
            rz = sigmoid1(g[:, :2 * d])
            r = rz[:, :d]
            z = rz[:, d:]
            n = jnp.tanh(g[:, 2 * d:3 * d] + r * g[:, 3 * d:])
            h = n + z * (h - n)
            outs.append(h)
            if len(outs) == GROUP:
                out_ref[:, base:base + GROUP * d] = jnp.concatenate(outs, axis=1)
                base += GROUP * d
                outs = []

        if outs:
            blk = outs[0] if len(outs) == 1 else jnp.concatenate(outs, axis=1)
            out_ref[:, base:base + len(outs) * d] = blk

    return kernel


def ts_decoder_forward(x, params, *, indim: int, timestep: int):
    """Pallas-backed TSDecoder.forward.

    x: (batch, finaldim) f32.  Returns (batch, timestep*indim) f32.
    """
    batch, finaldim = x.shape
    d = indim
    w_lin, b_lin, w_ih, b_ih, w_hh, b_hh = params

    # --- fused recurrence weight/bias (exploits next == h for steps >= 1):
    #     h @ w_ih_rz + h @ w_hh_rz == h @ (w_ih_rz + w_hh_rz)
    w_step = jnp.concatenate(
        [w_ih[:, :2 * d] + w_hh[:, :2 * d], w_ih[:, 2 * d:], w_hh[:, 2 * d:]],
        axis=1)                                             # (d, 4d)
    b_step = jnp.concatenate(
        [b_ih[:, :2 * d] + b_hh[:, :2 * d], b_ih[:, 2 * d:], b_hh[:, 2 * d:]],
        axis=1)                                             # (1, 4d)

    # --- fused Linear + step-0 hidden-gate matmul:
    #     h0 = x@w_lin + b_lin ; g0 = h0@w_hh  ==>  [h0 | g0] = x@W0 + B0
    w_lin_hh = w_lin @ w_hh                                 # (finaldim, 3d)
    b_lin_hh = b_lin @ w_hh                                 # (1, 3d)
    w0 = jnp.concatenate([w_lin, w_lin_hh], axis=1)         # (finaldim, 4d)
    b0 = jnp.concatenate(
        [b_lin,
         b_lin_hh[:, :2 * d] + b_ih[:, :2 * d] + b_hh[:, :2 * d],  # + b_rz
         b_lin_hh[:, 2 * d:] + b_hh[:, 2 * d:]],                   # + b_hh_n
        axis=1)                                             # (1, 4d)

    # --- pack operands: one weight slab + one bias array -> 3 input DMAs total.
    fd_pad = _round_up(finaldim, 8)
    d_pad = _round_up(d, 8)
    w_all = jnp.zeros((fd_pad + d_pad, 4 * d), jnp.float32)
    w_all = w_all.at[:finaldim].set(w0).at[fd_pad:fd_pad + d].set(w_step)
    b_all = jnp.concatenate([b0, b_step], axis=0)           # (2, 4d)

    # --- batch blocking: >=2 grid steps when batch > 16 (v7x 2-TC sharding),
    #     big blocks for large batch (fewer grid-step overheads on v5e/v6e).
    if batch <= 16:
        bm = batch
    else:
        bm = min(1024, _round_up(pl.cdiv(batch, 2), 8))
    grid = (pl.cdiv(batch, bm),)

    kernel = make_tsdecoder_kernel(indim, finaldim, timestep, fd_pad)

    fixed = lambda i: (0, 0)
    in_specs = [
        pl.BlockSpec((bm, finaldim), lambda i: (i, 0)),              # x
        pl.BlockSpec((fd_pad + d_pad, 4 * d), fixed),                # packed weights
        pl.BlockSpec((2, 4 * d), fixed),                             # packed biases
    ]
    out_specs = pl.BlockSpec((bm, timestep * d), lambda i: (i, 0))

    flops = 2 * batch * (finaldim * 4 * d + (timestep - 1) * d * 4 * d)
    transcendentals = 3 * timestep * batch * d               # tanh-based sigmoid + tanh
    bytes_accessed = 4 * (x.size + w_all.size + b_all.size + batch * timestep * d)

    return pl.pallas_call(
        kernel,
        out_shape=jax.ShapeDtypeStruct((batch, timestep * d), jnp.float32),
        grid=grid,
        in_specs=in_specs,
        out_specs=out_specs,
        compiler_params=pltpu.CompilerParams(
            dimension_semantics=("parallel",)),              # shards batch across TCs
        cost_estimate=pl.CostEstimate(
            flops=flops,
            transcendentals=transcendentals,
            bytes_accessed=bytes_accessed),
    )(x, w_all, b_all)


def init_params(key, indim: int, finaldim: int):
    """Deterministic parameter init matching PyTorch module shapes.

    nn.Linear(finaldim, indim): weight (indim, finaldim), bias (indim,)
    nn.GRU(indim, indim):       weight_ih_l0 / weight_hh_l0 (3*indim, indim),
                                bias_ih_l0 / bias_hh_l0 (3*indim,)
    Stored pre-transposed (y = x @ W + b) with gate order [r, z, n].
    """
    k = jax.random.split(key, 6)
    lin_bound = 1.0 / math.sqrt(finaldim)
    gru_bound = 1.0 / math.sqrt(indim)

    w_lin = jax.random.uniform(k[0], (finaldim, indim), jnp.float32,
                               -lin_bound, lin_bound)
    b_lin = jax.random.uniform(k[1], (1, indim), jnp.float32,
                               -lin_bound, lin_bound)
    w_ih = jax.random.uniform(k[2], (indim, 3 * indim), jnp.float32,
                              -gru_bound, gru_bound)
    b_ih = jax.random.uniform(k[3], (1, 3 * indim), jnp.float32,
                              -gru_bound, gru_bound)
    w_hh = jax.random.uniform(k[4], (indim, 3 * indim), jnp.float32,
                              -gru_bound, gru_bound)
    b_hh = jax.random.uniform(k[5], (1, 3 * indim), jnp.float32,
                              -gru_bound, gru_bound)
    return (w_lin, b_lin, w_ih, b_ih, w_hh, b_hh)


def reference_forward(x, params, *, indim: int, timestep: int):
    """Pure-JAX reference (mirrors torch.nn.GRU single-layer semantics)."""
    w_lin, b_lin, w_ih, b_ih, w_hh, b_hh = params
    d = indim
    h = x @ w_lin + b_lin
    nxt = jnp.zeros_like(h)
    outs = []
    for _ in range(timestep):
        gi = nxt @ w_ih + b_ih
        gh = h @ w_hh + b_hh
        r = jax.nn.sigmoid(gi[:, :d] + gh[:, :d])
        z = jax.nn.sigmoid(gi[:, d:2 * d] + gh[:, d:2 * d])
        n = jnp.tanh(gi[:, 2 * d:] + r * gh[:, 2 * d:])
        h = (1.0 - z) * n + z * h
        nxt = h
        outs.append(h)
    return jnp.concatenate(outs, axis=1)


if __name__ == "__main__":
    # Small shapes consistent with the module's forward.
    batch, finaldim, indim, timestep = 8, 48, 32, 6

    key = jax.random.PRNGKey(0)
    kx, kp = jax.random.split(key)
    x = jax.random.normal(kx, (batch, finaldim), jnp.float32)
    params = init_params(kp, indim, finaldim)

    out = ts_decoder_forward(x, params, indim=indim, timestep=timestep)
    out = jax.block_until_ready(out)
    ref = reference_forward(x, params, indim=indim, timestep=timestep)
    # Fused W0/W_step reassociate f32 sums -> ~1e-6-level differences.
    np.testing.assert_allclose(np.asarray(out), np.asarray(ref),
                               rtol=5e-5, atol=5e-5)
    assert out.shape == (batch, timestep * indim)

    # Multi-block + partial tail block path: batch=20 -> bm=16, grid=2 (last
    # block only 4 valid rows).  Exercises index_map and partial writeback.
    batch2 = 20
    x2 = jax.random.normal(jax.random.PRNGKey(3), (batch2, finaldim), jnp.float32)
    out2 = ts_decoder_forward(x2, params, indim=indim, timestep=timestep)
    out2 = jax.block_until_ready(out2)
    ref2 = reference_forward(x2, params, indim=indim, timestep=timestep)
    np.testing.assert_allclose(np.asarray(out2), np.asarray(ref2),
                               rtol=5e-5, atol=5e-5)
    assert out2.shape == (batch2, timestep * indim)

    print("KERNEL_OK")
</pallas_src>

<mosaic_0001>
module attributes {stable_mosaic.version = 11 : i64} {
  func.func @kernel(%arg0: i32, %arg1: memref<8x48xf32, #tpu.memory_space<vmem>>, %arg2: memref<80x128xf32, #tpu.memory_space<vmem>>, %arg3: memref<2x128xf32, #tpu.memory_space<vmem>>, %arg4: memref<8x192xf32, #tpu.memory_space<vmem>>) attributes {dimension_semantics = [#tpu.dimension_semantics<parallel>], iteration_bounds = array<i64: 1>, scalar_prefetch = 0 : i64, scratch_operands = 0 : i64, tpu.core_type = #tpu.core_type<tc>, window_params = [{transform_indices = @transform_0, window_bounds = array<i64: 8, 48>}, {pipeline_mode = #tpu.pipeline_mode<synchronous>, transform_indices = @transform_1, window_bounds = array<i64: 80, 128>}, {pipeline_mode = #tpu.pipeline_mode<synchronous>, transform_indices = @transform_2, window_bounds = array<i64: 2, 128>}, {transform_indices = @transform_3, window_bounds = array<i64: 8, 192>}]} {
    %c0 = arith.constant 0 : index
    %c0_0 = arith.constant 0 : index
    %0 = vector.load %arg3[%c0, %c0_0] : memref<2x128xf32, #tpu.memory_space<vmem>>, vector<1x128xf32>
    %c1 = arith.constant 1 : index
    %c0_1 = arith.constant 0 : index
    %1 = vector.load %arg3[%c1, %c0_1] : memref<2x128xf32, #tpu.memory_space<vmem>>, vector<1x128xf32>
    %2 = vector.extract_strided_slice %1 {offsets = [0, 64], sizes = [1, 32], strides = [1, 1]} : vector<1x128xf32> to vector<1x32xf32>
    %c0_2 = arith.constant 0 : index
    %c0_3 = arith.constant 0 : index
    %3 = vector.load %arg2[%c0_2, %c0_3] : memref<80x128xf32, #tpu.memory_space<vmem>>, vector<48x128xf32>
    %c48 = arith.constant 48 : index
    %c0_4 = arith.constant 0 : index
    %4 = vector.load %arg2[%c48, %c0_4] : memref<80x128xf32, #tpu.memory_space<vmem>>, vector<32x128xf32>
    %c0_5 = arith.constant 0 : index
    %c0_6 = arith.constant 0 : index
    %5 = vector.load %arg1[%c0_5, %c0_6] : memref<8x48xf32, #tpu.memory_space<vmem>>, vector<8x48xf32>
    %cst = arith.constant dense<0.000000e+00> : vector<8x128xf32>
    %6 = tpu.matmul %5, %3, %cst {dimension_numbers = #tpu.dot_dimension_numbers<[1], [0], [0], [1], [0, 0, 1, 1], [], []>} : vector<8x48xf32>, vector<48x128xf32>, vector<8x128xf32> -> vector<8x128xf32>
    %7 = vector.broadcast %0 : vector<1x128xf32> to vector<8x128xf32>
    %8 = arith.addf %6, %7 : vector<8x128xf32>
    %9 = vector.extract_strided_slice %8 {offsets = [0, 0], sizes = [8, 32], strides = [1, 1]} : vector<8x128xf32> to vector<8x32xf32>
    %10 = vector.extract_strided_slice %8 {offsets = [0, 32], sizes = [8, 64], strides = [1, 1]} : vector<8x128xf32> to vector<8x64xf32>
    %cst_7 = arith.constant 5.000000e-01 : f32
    %11 = vector.broadcast %cst_7 : f32 to vector<8x64xf32>
    %12 = arith.mulf %11, %10 : vector<8x64xf32>
    %13 = math.tanh %12 : vector<8x64xf32>
    %cst_8 = arith.constant 5.000000e-01 : f32
    %14 = vector.broadcast %cst_8 : f32 to vector<8x64xf32>
    %15 = arith.mulf %14, %13 : vector<8x64xf32>
    %cst_9 = arith.constant 5.000000e-01 : f32
    %16 = vector.broadcast %cst_9 : f32 to vector<8x64xf32>
    %17 = arith.addf %15, %16 : vector<8x64xf32>
    %18 = vector.extract_strided_slice %17 {offsets = [0, 0], sizes = [8, 32], strides = [1, 1]} : vector<8x64xf32> to vector<8x32xf32>
    %19 = vector.extract_strided_slice %17 {offsets = [0, 32], sizes = [8, 32], strides = [1, 1]} : vector<8x64xf32> to vector<8x32xf32>
    %20 = vector.extract_strided_slice %8 {offsets = [0, 96], sizes = [8, 32], strides = [1, 1]} : vector<8x128xf32> to vector<8x32xf32>
    %21 = arith.mulf %18, %20 : vector<8x32xf32>
    %22 = vector.broadcast %2 : vector<1x32xf32> to vector<8x32xf32>
    %23 = arith.addf %22, %21 : vector<8x32xf32>
    %24 = math.tanh %23 : vector<8x32xf32>
    %25 = arith.subf %9, %24 : vector<8x32xf32>
    %26 = arith.mulf %19, %25 : vector<8x32xf32>
    %27 = arith.addf %24, %26 : vector<8x32xf32>
    %cst_10 = arith.constant dense<0.000000e+00> : vector<8x128xf32>
    %28 = tpu.matmul %27, %4, %cst_10 {dimension_numbers = #tpu.dot_dimension_numbers<[1], [0], [0], [1], [0, 0, 1, 1], [], []>} : vector<8x32xf32>, vector<32x128xf32>, vector<8x128xf32> -> vector<8x128xf32>
    %29 = vector.broadcast %1 : vector<1x128xf32> to vector<8x128xf32>
    %30 = arith.addf %28, %29 : vector<8x128xf32>
    %31 = vector.extract_strided_slice %30 {offsets = [0, 0], sizes = [8, 64], strides = [1, 1]} : vector<8x128xf32> to vector<8x64xf32>
    %cst_11 = arith.constant 5.000000e-01 : f32
    %32 = vector.broadcast %cst_11 : f32 to vector<8x64xf32>
    %33 = arith.mulf %32, %31 : vector<8x64xf32>
    %34 = math.tanh %33 : vector<8x64xf32>
    %cst_12 = arith.constant 5.000000e-01 : f32
    %35 = vector.broadcast %cst_12 : f32 to vector<8x64xf32>
    %36 = arith.mulf %35, %34 : vector<8x64xf32>
    %cst_13 = arith.constant 5.000000e-01 : f32
    %37 = vector.broadcast %cst_13 : f32 to vector<8x64xf32>
    %38 = arith.addf %36, %37 : vector<8x64xf32>
    %39 = vector.extract_strided_slice %38 {offsets = [0, 0], sizes = [8, 32], strides = [1, 1]} : vector<8x64xf32> to vector<8x32xf32>
    %40 = vector.extract_strided_slice %38 {offsets = [0, 32], sizes = [8, 32], strides = [1, 1]} : vector<8x64xf32> to vector<8x32xf32>
    %41 = vector.extract_strided_slice %30 {offsets = [0, 64], sizes = [8, 32], strides = [1, 1]} : vector<8x128xf32> to vector<8x32xf32>
    %42 = vector.extract_strided_slice %30 {offsets = [0, 96], sizes = [8, 32], strides = [1, 1]} : vector<8x128xf32> to vector<8x32xf32>
    %43 = arith.mulf %39, %42 : vector<8x32xf32>
    %44 = arith.addf %41, %43 : vector<8x32xf32>
    %45 = math.tanh %44 : vector<8x32xf32>
    %46 = arith.subf %27, %45 : vector<8x32xf32>
    %47 = arith.mulf %40, %46 : vector<8x32xf32>
    %48 = arith.addf %45, %47 : vector<8x32xf32>
    %cst_14 = arith.constant dense<0.000000e+00> : vector<8x128xf32>
    %49 = tpu.matmul %48, %4, %cst_14 {dimension_numbers = #tpu.dot_dimension_numbers<[1], [0], [0], [1], [0, 0, 1, 1], [], []>} : vector<8x32xf32>, vector<32x128xf32>, vector<8x128xf32> -> vector<8x128xf32>
    %50 = vector.broadcast %1 : vector<1x128xf32> to vector<8x128xf32>
    %51 = arith.addf %49, %50 : vector<8x128xf32>
    %52 = vector.extract_strided_slice %51 {offsets = [0, 0], sizes = [8, 64], strides = [1, 1]} : vector<8x128xf32> to vector<8x64xf32>
    %cst_15 = arith.constant 5.000000e-01 : f32
    %53 = vector.broadcast %cst_15 : f32 to vector<8x64xf32>
    %54 = arith.mulf %53, %52 : vector<8x64xf32>
    %55 = math.tanh %54 : vector<8x64xf32>
    %cst_16 = arith.constant 5.000000e-01 : f32
    %56 = vector.broadcast %cst_16 : f32 to vector<8x64xf32>
    %57 = arith.mulf %56, %55 : vector<8x64xf32>
    %cst_17 = arith.constant 5.000000e-01 : f32
    %58 = vector.broadcast %cst_17 : f32 to vector<8x64xf32>
    %59 = arith.addf %57, %58 : vector<8x64xf32>
    %60 = vector.extract_strided_slice %59 {offsets = [0, 0], sizes = [8, 32], strides = [1, 1]} : vector<8x64xf32> to vector<8x32xf32>
    %61 = vector.extract_strided_slice %59 {offsets = [0, 32], sizes = [8, 32], strides = [1, 1]} : vector<8x64xf32> to vector<8x32xf32>
    %62 = vector.extract_strided_slice %51 {offsets = [0, 64], sizes = [8, 32], strides = [1, 1]} : vector<8x128xf32> to vector<8x32xf32>
    %63 = vector.extract_strided_slice %51 {offsets = [0, 96], sizes = [8, 32], strides = [1, 1]} : vector<8x128xf32> to vector<8x32xf32>
    %64 = arith.mulf %60, %63 : vector<8x32xf32>
    %65 = arith.addf %62, %64 : vector<8x32xf32>
    %66 = math.tanh %65 : vector<8x32xf32>
    %67 = arith.subf %48, %66 : vector<8x32xf32>
    %68 = arith.mulf %61, %67 : vector<8x32xf32>
    %69 = arith.addf %66, %68 : vector<8x32xf32>
    %cst_18 = arith.constant dense<0.000000e+00> : vector<8x128xf32>
    %70 = tpu.matmul %69, %4, %cst_18 {dimension_numbers = #tpu.dot_dimension_numbers<[1], [0], [0], [1], [0, 0, 1, 1], [], []>} : vector<8x32xf32>, vector<32x128xf32>, vector<8x128xf32> -> vector<8x128xf32>
    %71 = vector.broadcast %1 : vector<1x128xf32> to vector<8x128xf32>
    %72 = arith.addf %70, %71 : vector<8x128xf32>
    %73 = vector.extract_strided_slice %72 {offsets = [0, 0], sizes = [8, 64], strides = [1, 1]} : vector<8x128xf32> to vector<8x64xf32>
    %cst_19 = arith.constant 5.000000e-01 : f32
    %74 = vector.broadcast %cst_19 : f32 to vector<8x64xf32>
    %75 = arith.mulf %74, %73 : vector<8x64xf32>
    %76 = math.tanh %75 : vector<8x64xf32>
    %cst_20 = arith.constant 5.000000e-01 : f32
    %77 = vector.broadcast %cst_20 : f32 to vector<8x64xf32>
    %78 = arith.mulf %77, %76 : vector<8x64xf32>
    %cst_21 = arith.constant 5.000000e-01 : f32
    %79 = vector.broadcast %cst_21 : f32 to vector<8x64xf32>
    %80 = arith.addf %78, %79 : vector<8x64xf32>
    %81 = vector.extract_strided_slice %80 {offsets = [0, 0], sizes = [8, 32], strides = [1, 1]} : vector<8x64xf32> to vector<8x32xf32>
    %82 = vector.extract_strided_slice %80 {offsets = [0, 32], sizes = [8, 32], strides = [1, 1]} : vector<8x64xf32> to vector<8x32xf32>
    %83 = vector.extract_strided_slice %72 {offsets = [0, 64], sizes = [8, 32], strides = [1, 1]} : vector<8x128xf32> to vector<8x32xf32>
    %84 = vector.extract_strided_slice %72 {offsets = [0, 96], sizes = [8, 32], strides = [1, 1]} : vector<8x128xf32> to vector<8x32xf32>
    %85 = arith.mulf %81, %84 : vector<8x32xf32>
    %86 = arith.addf %83, %85 : vector<8x32xf32>
    %87 = math.tanh %86 : vector<8x32xf32>
    %88 = arith.subf %69, %87 : vector<8x32xf32>
    %89 = arith.mulf %82, %88 : vector<8x32xf32>
    %90 = arith.addf %87, %89 : vector<8x32xf32>
    %91 = tpu.concatenate %27, %48, %69, %90 in 1 : vector<8x32xf32>, vector<8x32xf32>, vector<8x32xf32>, vector<8x32xf32> -> vector<8x128xf32>
    %c0_22 = arith.constant 0 : index
    %c0_23 = arith.constant 0 : index
    %92 = vector.load %arg4[%c0_22, %c0_23] : memref<8x192xf32, #tpu.memory_space<vmem>>, vector<8x128xf32>
    tpu.vector_store %arg4[%c0_22, %c0_23], %91 {strides = array<i32>} : memref<8x192xf32, #tpu.memory_space<vmem>>, vector<8x128xf32>,
    %cst_24 = arith.constant dense<0.000000e+00> : vector<8x128xf32>
    %93 = tpu.matmul %90, %4, %cst_24 {dimension_numbers = #tpu.dot_dimension_numbers<[1], [0], [0], [1], [0, 0, 1, 1], [], []>} : vector<8x32xf32>, vector<32x128xf32>, vector<8x128xf32> -> vector<8x128xf32>
    %94 = vector.broadcast %1 : vector<1x128xf32> to vector<8x128xf32>
    %95 = arith.addf %93, %94 : vector<8x128xf32>
    %96 = vector.extract_strided_slice %95 {offsets = [0, 0], sizes = [8, 64], strides = [1, 1]} : vector<8x128xf32> to vector<8x64xf32>
    %cst_25 = arith.constant 5.000000e-01 : f32
    %97 = vector.broadcast %cst_25 : f32 to vector<8x64xf32>
    %98 = arith.mulf %97, %96 : vector<8x64xf32>
    %99 = math.tanh %98 : vector<8x64xf32>
    %cst_26 = arith.constant 5.000000e-01 : f32
    %100 = vector.broadcast %cst_26 : f32 to vector<8x64xf32>
    %101 = arith.mulf %100, %99 : vector<8x64xf32>
    %cst_27 = arith.constant 5.000000e-01 : f32
    %102 = vector.broadcast %cst_27 : f32 to vector<8x64xf32>
    %103 = arith.addf %101, %102 : vector<8x64xf32>
    %104 = vector.extract_strided_slice %103 {offsets = [0, 0], sizes = [8, 32], strides = [1, 1]} : vector<8x64xf32> to vector<8x32xf32>
    %105 = vector.extract_strided_slice %103 {offsets = [0, 32], sizes = [8, 32], strides = [1, 1]} : vector<8x64xf32> to vector<8x32xf32>
    %106 = vector.extract_strided_slice %95 {offsets = [0, 64], sizes = [8, 32], strides = [1, 1]} : vector<8x128xf32> to vector<8x32xf32>
    %107 = vector.extract_strided_slice %95 {offsets = [0, 96], sizes = [8, 32], strides = [1, 1]} : vector<8x128xf32> to vector<8x32xf32>
    %108 = arith.mulf %104, %107 : vector<8x32xf32>
    %109 = arith.addf %106, %108 : vector<8x32xf32>
    %110 = math.tanh %109 : vector<8x32xf32>
    %111 = arith.subf %90, %110 : vector<8x32xf32>
    %112 = arith.mulf %105, %111 : vector<8x32xf32>
    %113 = arith.addf %110, %112 : vector<8x32xf32>
    %cst_28 = arith.constant dense<0.000000e+00> : vector<8x128xf32>
    %114 = tpu.matmul %113, %4, %cst_28 {dimension_numbers = #tpu.dot_dimension_numbers<[1], [0], [0], [1], [0, 0, 1, 1], [], []>} : vector<8x32xf32>, vector<32x128xf32>, vector<8x128xf32> -> vector<8x128xf32>
    %115 = vector.broadcast %1 : vector<1x128xf32> to vector<8x128xf32>
    %116 = arith.addf %114, %115 : vector<8x128xf32>
    %117 = vector.extract_strided_slice %116 {offsets = [0, 0], sizes = [8, 64], strides = [1, 1]} : vector<8x128xf32> to vector<8x64xf32>
    %cst_29 = arith.constant 5.000000e-01 : f32
    %118 = vector.broadcast %cst_29 : f32 to vector<8x64xf32>
    %119 = arith.mulf %118, %117 : vector<8x64xf32>
    %120 = math.tanh %119 : vector<8x64xf32>
    %cst_30 = arith.constant 5.000000e-01 : f32
    %121 = vector.broadcast %cst_30 : f32 to vector<8x64xf32>
    %122 = arith.mulf %121, %120 : vector<8x64xf32>
    %cst_31 = arith.constant 5.000000e-01 : f32
    %123 = vector.broadcast %cst_31 : f32 to vector<8x64xf32>
    %124 = arith.addf %122, %123 : vector<8x64xf32>
    %125 = vector.extract_strided_slice %124 {offsets = [0, 0], sizes = [8, 32], strides = [1, 1]} : vector<8x64xf32> to vector<8x32xf32>
    %126 = vector.extract_strided_slice %124 {offsets = [0, 32], sizes = [8, 32], strides = [1, 1]} : vector<8x64xf32> to vector<8x32xf32>
    %127 = vector.extract_strided_slice %116 {offsets = [0, 64], sizes = [8, 32], strides = [1, 1]} : vector<8x128xf32> to vector<8x32xf32>
    %128 = vector.extract_strided_slice %116 {offsets = [0, 96], sizes = [8, 32], strides = [1, 1]} : vector<8x128xf32> to vector<8x32xf32>
    %129 = arith.mulf %125, %128 : vector<8x32xf32>
    %130 = arith.addf %127, %129 : vector<8x32xf32>
    %131 = math.tanh %130 : vector<8x32xf32>
    %132 = arith.subf %113, %131 : vector<8x32xf32>
    %133 = arith.mulf %126, %132 : vector<8x32xf32>
    %134 = arith.addf %131, %133 : vector<8x32xf32>
    %135 = tpu.concatenate %113, %134 in 1 : vector<8x32xf32>, vector<8x32xf32> -> vector<8x64xf32>
    %c0_32 = arith.constant 0 : index
    %c128 = arith.constant 128 : index
    %136 = vector.load %arg4[%c0_32, %c128] : memref<8x192xf32, #tpu.memory_space<vmem>>, vector<8x64xf32>
    tpu.vector_store %arg4[%c0_32, %c128], %135 {strides = array<i32>} : memref<8x192xf32, #tpu.memory_space<vmem>>, vector<8x64xf32>,
    return
  }
  func.func @transform_0(%arg0: i32) -> (i32, i32) {
    %c0_i32 = arith.constant 0 : i32
    %c0_i32_0 = arith.constant 0 : i32
    return %arg0, %c0_i32 : i32, i32
  }
  func.func @transform_1(%arg0: i32) -> (i32, i32) {
    %c0_i32 = arith.constant 0 : i32
    %c0_i32_0 = arith.constant 0 : i32
    %c0_i32_1 = arith.constant 0 : i32
    return %c0_i32, %c0_i32_0 : i32, i32
  }
  func.func @transform_2(%arg0: i32) -> (i32, i32) {
    %c0_i32 = arith.constant 0 : i32
    %c0_i32_0 = arith.constant 0 : i32
    %c0_i32_1 = arith.constant 0 : i32
    return %c0_i32, %c0_i32_0 : i32, i32
  }
  func.func @transform_3(%arg0: i32) -> (i32, i32) {
    %c0_i32 = arith.constant 0 : i32
    %c0_i32_0 = arith.constant 0 : i32
    return %arg0, %c0_i32 : i32, i32
  }
}

</mosaic_0001>

<llo_original>
// kernel: tpu_custom_call.1
$region0: #{tpu_custom_call.1}
  #allocation0 [shape = 'u32[]', space=smem, size = 0x4, offset = 0x4, fixed_abs, tag = 'smem constant byte address 0x4 - core index']
  #allocation1 [shape = 'u32[144,128]{1,0:T(1,128)}', space=vmem, size = 0x12000, scoped, tag = 'internal scratch']
  %s0 = inlined_call_operand.hbm [shape: f32[8,48], index: 0, kind: input, shape index: {}]
  %s1 = inlined_call_operand.hbm [shape: f32[80,128], index: 1, kind: input, shape index: {}]
  %s2 = inlined_call_operand.vmem [shape: f32[2,128], index: 2, kind: input, shape index: {}]
  %s3 = inlined_call_operand.hbm [shape: f32[8,192], index: 3, kind: output, shape index: {}]
  %s4 = sld [smem:[#allocation0]]
  $region30: #{tpu_custom_call.1} parent=0
    _
  %s6 = ssub.s32 1, %s4
  %s7 = scalar_select 0, %s6, %s4
  $region1: #{tpu_custom_call.1} parent=0
    #allocation2 [shape = 'u8[4096]{0}', space=vmem, size = 0x1000, scoped, tag = 'input window, operand 0, single buffered']
    #allocation3 [shape = 's32[1]{0}', space=sflag, size = 0x4, scoped, tag = 'scoped memory for tpu_custom_call.1']
    #allocation4 [shape = 's32[1]{0}', space=sflag, size = 0x4, scoped, tag = 'scoped memory for tpu_custom_call.1']
    #allocation5 [shape = 'u8[40960]{0}', space=vmem, size = 0xa000, scoped, tag = 'input window, operand 1, single buffered']
    #allocation6 [shape = 's32[1]{0}', space=sflag, size = 0x4, scoped, tag = 'scoped memory for tpu_custom_call.1']
    #allocation7 [shape = 'u8[8192]{0}', space=vmem, size = 0x2000, scoped, tag = 'output window, operand 0, single buffered']
    %8 = vsyncpa [#allocation3], 0
    %9 = vsyncpa [#allocation6], 0
    %10 = vsyncpa [#allocation4], 0
    // Predicated region
    $region2: #{tpu_custom_call.1} parent=1 // pred_check
      _
    $region3: #{tpu_custom_call.1} parent=1 // pred_check_branch
      %12 = sbr.rel (0) target = $region5
    $region4: #{tpu_custom_call.1} parent=1 // pred_region
      %s14 = ssub.s32 128, 128
      %15 = vsyncadd [#allocation3], %s14
      %s17 = sshll.u32 [#allocation2], 4
      %s18 = int_to_ptr.vmem [resolvable:$true] %s17
      %20 = dma.hbm_to_vmem [thread:$0]  %s0, 128, %s18, [#allocation3]
    $region5: #{tpu_custom_call.1} parent=1 // pred_fallthru
      _
    // Predicated region
    $region6: #{tpu_custom_call.1} parent=1 // pred_check
      _
    $region7: #{tpu_custom_call.1} parent=1 // pred_check_branch
      %22 = sbr.rel (0) target = $region9
    $region8: #{tpu_custom_call.1} parent=1 // pred_region
      %s24 = ssub.s32 1280, 1280
      %25 = vsyncadd [#allocation6], %s24
      %s26 = sshll.u32 [#allocation5], 4
      %s27 = int_to_ptr.vmem [resolvable:$true] %s26
      %32 = dma.hbm_to_vmem [thread:$0]  %s1, 1280, %s27, [#allocation6], 128, 128, 8
    $region9: #{tpu_custom_call.1} parent=1 // pred_fallthru
      _
    // Predicated region
    $region10: #{tpu_custom_call.1} parent=1 // pred_check
      _
    $region11: #{tpu_custom_call.1} parent=1 // pred_check_branch
      %34 = sbr.rel (0) target = $region13
    $region12: #{tpu_custom_call.1} parent=1 // pred_region
      _
    $region13: #{tpu_custom_call.1} parent=1 // pred_fallthru
      _
    // Predicated region
    $region14: #{tpu_custom_call.1} parent=1 // pred_check
      _
    $region15: #{tpu_custom_call.1} parent=1 // pred_check_branch
      %36 = sbr.rel (0) target = $region17
    $region16: #{tpu_custom_call.1} parent=1 // pred_region
      %37 = dma.done [#allocation3], 128
    $region17: #{tpu_custom_call.1} parent=1 // pred_fallthru
      _
    // Predicated region
    $region18: #{tpu_custom_call.1} parent=1 // pred_check
      _
    $region19: #{tpu_custom_call.1} parent=1 // pred_check_branch
      %39 = sbr.rel (0) target = $region21
    $region20: #{tpu_custom_call.1} parent=1 // pred_region
      %40 = dma.done [#allocation6], 1280
    $region21: #{tpu_custom_call.1} parent=1 // pred_fallthru
      _
    %v41 = vld [vmem:[%s2] sm:$0x1]
    %v42 = vld [vmem:[%s2 + $0x1] sm:$0x1]
    %v43 = vld [vmem:[#allocation5] sm:$0xff]
    %v44 = vld [vmem:[#allocation5 + $0x8] sm:$0xff]
    %v45 = vld [vmem:[#allocation5 + $0x10] sm:$0xff]
    %v46 = vld [vmem:[#allocation5 + $0x18] sm:$0xff]
    %v47 = vld [vmem:[#allocation5 + $0x20] sm:$0xff]
    %v48 = vld [vmem:[#allocation5 + $0x28] sm:$0xff]
    %v49 = vld [vmem:[#allocation5 + $0x30] sm:$0xff]
    %v50 = vld [vmem:[#allocation5 + $0x38] sm:$0xff]
    %v51 = vld [vmem:[#allocation5 + $0x40] sm:$0xff]
    %v52 = vld [vmem:[#allocation5 + $0x48] sm:$0xff]
    %v53 = vld [vmem:[#allocation2] sm:$0xff]
    %v54 = vlaneseq
    %v55 = vshrl.u32 %v54, 7
    %v56 = vsub.s32 0, %v55
    %v57 = vrot.slane %v41, %v56
    %vm58 = vcmask 392192
    %v60 = vsel %vm58, %v53, 0
    %62 = vmatprep.subr.mxu0 0.0
    %63 = vmatpush1.msra.mxu0 %v43
    %64 = vmatprep.subr.mxu0 0.0
    %65 = vmatpush1.msra.mxu0 %v44
    %66 = vmatprep.subr.mxu0 0.0
    %67 = vmatpush1.msra.mxu0 %v45
    %68 = vmatprep.subr.mxu0 0.0
    %69 = vmatpush1.msra.mxu0 %v46
    %70 = vmatprep.subr.mxu0 0.0
    %71 = vmatpush1.msra.mxu0 %v47
    %72 = vmatprep.subr.mxu0 0.0
    %73 = vmatpush1.msra.mxu0 %v48
    %74 = vmatprep.subr.mxu0 0.0
    %75 = vmatpush1.msra.mxu0 0.0
    %76 = vmatprep.subr.mxu0 0.0
    %77 = vmatpush1.msra.mxu0 0.0
    %78 = vmatprep.subr.mxu0 0.0
    %79 = vmatpush1.msra.mxu0 0.0
    %80 = vmatprep.subr.mxu0 0.0
    %81 = vmatpush1.msra.mxu0 0.0
    %82 = vmatprep.subr.mxu0 0.0
    %83 = vmatpush1.msra.mxu0 0.0
    %84 = vmatprep.subr.mxu0 0.0
    %85 = vmatpush1.msra.mxu0 0.0
    %86 = vmatprep.subr.mxu0 0.0
    %87 = vmatpush1.msra.mxu0 0.0
    %88 = vmatprep.subr.mxu0 0.0
    %89 = vmatpush1.msra.mxu0 0.0
    %90 = vmatprep.subr.mxu0 0.0
    %91 = vmatpush1.msra.mxu0 0.0
    %92 = vmatprep.subr.mxu0 0.0
    %93 = vmatpush1.msra.mxu0 0.0
    %94 = vmatprep.subr.mxu0 0.0
    %95 = vmatpush1.msra.mxu0 0.0
    %96 = vmatprep.subr.mxu0 0.0
    %97 = vmatpush1.msra.mxu0 0.0
    %98 = vmatprep.subr.mxu0 0.0
    %99 = vmatpush1.msra.mxu0 0.0
    %100 = vmatprep.subr.mxu0 0.0
    %101 = vmatpush1.msra.mxu0 0.0
    %102 = vmatprep.subr.mxu0 0.0
    %103 = vmatpush1.msra.mxu0 0.0
    %104 = vmatprep.subr.mxu0 0.0
    %105 = vmatpush1.msra.mxu0 0.0
    %106 = vmatprep.subr.mxu0 0.0
    %107 = vmatpush1.msra.mxu0 0.0
    %108 = vmatprep.subr.mxu0 0.0
    %109 = vmatpush1.msra.mxu0 0.0
    %110 = vmatprep.subr.mxu0 0.0
    %111 = vmatpush1.msra.mxu0 0.0
    %112 = vmatprep.subr.mxu0 0.0
    %113 = vmatpush1.msra.mxu0 0.0
    %114 = vmatprep.subr.mxu0 0.0
    %115 = vmatpush1.msra.mxu0 0.0
    %116 = vmatprep.subr.mxu0 0.0
    %117 = vmatpush1.msra.mxu0 0.0
    %118 = vmatprep.subr.mxu0 0.0
    %119 = vmatpush1.msra.mxu0 0.0
    %120 = vmatprep.subr.mxu0 0.0
    %121 = vmatpush1.msra.mxu0 0.0
    %122 = vmatprep.subr.mxu0 0.0
    %123 = vmatpush1.msra.mxu0 0.0
    %124 = vmatprep.subr.mxu0 0.0
    %125 = vmatpush1.msra.mxu0 0.0
    %126 = vmatprep.mubr.f32.mxu0 0.0
    %127 = vmatmul.mubr.f32.gmra.mrb[0].mxu0 %v60
    %v128 = vpop.f32.mrb[0].mxu0
    %v129 = vadd.f32 %v57, %v128
    %v130 = vpop.f32.mrb[0].mxu0
    %131 = vdwg.mxu0
    %v132 = vmul.f32 %v129, 0.5
    %v133 = vtanh.pop %v132
    %v134 = vmul.f32 %v133, 0.5
    %v135 = vadd.f32 %v134, 0.5
    %137 = vrot.lane.b32.xlu0 %v129, 64
    %v138 = vpop.permute.xlu0 %137
    %v140 = vmul.f32 %v135, %v138
    %v141 = vlaneseq
    %v142 = vshrl.u32 %v141, 7
    %v143 = vsub.s32 0, %v142
    %v144 = vrot.slane %v42, %v143
    %146 = vrot.lane.b32.xlu0 %v140, 32
    %v147 = vpop.permute.xlu0 %146
    %v149 = vadd.f32 %v144, %v147
    %v150 = vtanh.pop %v149
    %152 = vrot.lane.b32.xlu0 %v150, 64
    %v153 = vpop.permute.xlu0 %152
    %v155 = vsub.f32 %v129, %v153
    %157 = vrot.lane.b32.xlu0 %v155, 64
    %v158 = vpop.permute.xlu0 %157
    %v160 = vmul.f32 %v135, %v158
    %v161 = vadd.f32 %v150, %v160
    %163 = vrot.lane.b32.xlu0 %v161, 64
    %v164 = vpop.permute.xlu0 %163
    %vm165 = vcmask 261120
    %v166 = vsel %vm165, %v164, 0
    %168 = vmatprep.subr.mxu0 0.0
    %169 = vmatpush1.msra.mxu0 %v49
    %170 = vmatprep.subr.mxu0 0.0
    %171 = vmatpush1.msra.mxu0 %v50
    %172 = vmatprep.subr.mxu0 0.0
    %173 = vmatpush1.msra.mxu0 %v51
    %174 = vmatprep.subr.mxu0 0.0
    %175 = vmatpush1.msra.mxu0 %v52
    %176 = vmatprep.subr.mxu0 0.0
    %177 = vmatpush1.msra.mxu0 0.0
    %178 = vmatprep.subr.mxu0 0.0
    %179 = vmatpush1.msra.mxu0 0.0
    %180 = vmatprep.subr.mxu0 0.0
    %181 = vmatpush1.msra.mxu0 0.0
    %182 = vmatprep.subr.mxu0 0.0
    %183 = vmatpush1.msra.mxu0 0.0
    %184 = vmatprep.subr.mxu0 0.0
    %185 = vmatpush1.msra.mxu0 0.0
    %186 = vmatprep.subr.mxu0 0.0
    %187 = vmatpush1.msra.mxu0 0.0
    %188 = vmatprep.subr.mxu0 0.0
    %189 = vmatpush1.msra.mxu0 0.0
    %190 = vmatprep.subr.mxu0 0.0
    %191 = vmatpush1.msra.mxu0 0.0
    %192 = vmatprep.subr.mxu0 0.0
    %193 = vmatpush1.msra.mxu0 0.0
    %194 = vmatprep.subr.mxu0 0.0
    %195 = vmatpush1.msra.mxu0 0.0
    %196 = vmatprep.subr.mxu0 0.0
    %197 = vmatpush1.msra.mxu0 0.0
    %198 = vmatprep.subr.mxu0 0.0
    %199 = vmatpush1.msra.mxu0 0.0
    %200 = vmatprep.subr.mxu0 0.0
    %201 = vmatpush1.msra.mxu0 0.0
    %202 = vmatprep.subr.mxu0 0.0
    %203 = vmatpush1.msra.mxu0 0.0
    %204 = vmatprep.subr.mxu0 0.0
    %205 = vmatpush1.msra.mxu0 0.0
    %206 = vmatprep.subr.mxu0 0.0
    %207 = vmatpush1.msra.mxu0 0.0
    %208 = vmatprep.subr.mxu0 0.0
    %209 = vmatpush1.msra.mxu0 0.0
    %210 = vmatprep.subr.mxu0 0.0
    %211 = vmatpush1.msra.mxu0 0.0
    %212 = vmatprep.subr.mxu0 0.0
    %213 = vmatpush1.msra.mxu0 0.0
    %214 = vmatprep.subr.mxu0 0.0
    %215 = vmatpush1.msra.mxu0 0.0
    %216 = vmatprep.subr.mxu0 0.0
    %217 = vmatpush1.msra.mxu0 0.0
    %218 = vmatprep.subr.mxu0 0.0
    %219 = vmatpush1.msra.mxu0 0.0
    %220 = vmatprep.subr.mxu0 0.0
    %221 = vmatpush1.msra.mxu0 0.0
    %222 = vmatprep.subr.mxu0 0.0
    %223 = vmatpush1.msra.mxu0 0.0
    %224 = vmatprep.subr.mxu0 0.0
    %225 = vmatpush1.msra.mxu0 0.0
    %226 = vmatprep.subr.mxu0 0.0
    %227 = vmatpush1.msra.mxu0 0.0
    %228 = vmatprep.subr.mxu0 0.0
    %229 = vmatpush1.msra.mxu0 0.0
    %230 = vmatprep.subr.mxu0 0.0
    %231 = vmatpush1.msra.mxu0 0.0
    %232 = vmatprep.mubr.f32.mxu0 0.0
    %233 = vmatmul.mubr.f32.gmra.mrb[0].mxu0 %v166
    %v234 = vpop.f32.mrb[0].mxu0
    %v235 = vadd.f32 %v144, %v234
    %v236 = vpop.f32.mrb[0].mxu0
    %237 = vdwg.mxu0
    %v238 = vmul.f32 %v235, 0.5
    %v239 = vtanh.pop %v238
    %v240 = vmul.f32 %v239, 0.5
    %v241 = vadd.f32 %v240, 0.5
    %243 = vrot.lane.b32.xlu0 %v235, 32
    %v244 = vpop.permute.xlu0 %243
    %v246 = vmul.f32 %v241, %v244
    %248 = vrot.lane.b32.xlu0 %v246, 64
    %v249 = vpop.permute.xlu0 %248
    %v251 = vadd.f32 %v235, %v249
    %v252 = vtanh.pop %v251
    %v253 = vsub.f32 %v161, %v252
    %255 = vrot.lane.b32.xlu0 %v253, 96
    %v256 = vpop.permute.xlu0 %255
    %v258 = vmul.f32 %v241, %v256
    %260 = vrot.lane.b32.xlu0 %v258, 32
    %v261 = vpop.permute.xlu0 %260
    %v263 = vadd.f32 %v252, %v261
    %265 = vrot.lane.b32.xlu0 %v263, 64
    %v266 = vpop.permute.xlu0 %265
    %v267 = vsel %vm165, %v266, 0
    %269 = vmatprep.subr.mxu0 0.0
    %270 = vmatpush1.msra.mxu0 %v49
    %271 = vmatprep.subr.mxu0 0.0
    %272 = vmatpush1.msra.mxu0 %v50
    %273 = vmatprep.subr.mxu0 0.0
    %274 = vmatpush1.msra.mxu0 %v51
    %275 = vmatprep.subr.mxu0 0.0
    %276 = vmatpush1.msra.mxu0 %v52
    %277 = vmatprep.subr.mxu0 0.0
    %278 = vmatpush1.msra.mxu0 0.0
    %279 = vmatprep.subr.mxu0 0.0
    %280 = vmatpush1.msra.mxu0 0.0
    %281 = vmatprep.subr.mxu0 0.0
    %282 = vmatpush1.msra.mxu0 0.0
    %283 = vmatprep.subr.mxu0 0.0
    %284 = vmatpush1.msra.mxu0 0.0
    %285 = vmatprep.subr.mxu0 0.0
    %286 = vmatpush1.msra.mxu0 0.0
    %287 = vmatprep.subr.mxu0 0.0
    %288 = vmatpush1.msra.mxu0 0.0
    %289 = vmatprep.subr.mxu0 0.0
    %290 = vmatpush1.msra.mxu0 0.0
    %291 = vmatprep.subr.mxu0 0.0
    %292 = vmatpush1.msra.mxu0 0.0
    %293 = vmatprep.subr.mxu0 0.0
    %294 = vmatpush1.msra.mxu0 0.0
    %295 = vmatprep.subr.mxu0 0.0
    %296 = vmatpush1.msra.mxu0 0.0
    %297 = vmatprep.subr.mxu0 0.0
    %298 = vmatpush1.msra.mxu0 0.0
    %299 = vmatprep.subr.mxu0 0.0
    %300 = vmatpush1.msra.mxu0 0.0
    %301 = vmatprep.subr.mxu0 0.0
    %302 = vmatpush1.msra.mxu0 0.0
    %303 = vmatprep.subr.mxu0 0.0
    %304 = vmatpush1.msra.mxu0 0.0
    %305 = vmatprep.subr.mxu0 0.0
    %306 = vmatpush1.msra.mxu0 0.0
    %307 = vmatprep.subr.mxu0 0.0
    %308 = vmatpush1.msra.mxu0 0.0
    %309 = vmatprep.subr.mxu0 0.0
    %310 = vmatpush1.msra.mxu0 0.0
    %311 = vmatprep.subr.mxu0 0.0
    %312 = vmatpush1.msra.mxu0 0.0
    %313 = vmatprep.subr.mxu0 0.0
    %314 = vmatpush1.msra.mxu0 0.0
    %315 = vmatprep.subr.mxu0 0.0
    %316 = vmatpush1.msra.mxu0 0.0
    %317 = vmatprep.subr.mxu0 0.0
    %318 = vmatpush1.msra.mxu0 0.0
    %319 = vmatprep.subr.mxu0 0.0
    %320 = vmatpush1.msra.mxu0 0.0
    %321 = vmatprep.subr.mxu0 0.0
    %322 = vmatpush1.msra.mxu0 0.0
    %323 = vmatprep.subr.mxu0 0.0
    %324 = vmatpush1.msra.mxu0 0.0
    %325 = vmatprep.subr.mxu0 0.0
    %326 = vmatpush1.msra.mxu0 0.0
    %327 = vmatprep.subr.mxu0 0.0
    %328 = vmatpush1.msra.mxu0 0.0
    %329 = vmatprep.subr.mxu0 0.0
    %330 = vmatpush1.msra.mxu0 0.0
    %331 = vmatprep.subr.mxu0 0.0
    %332 = vmatpush1.msra.mxu0 0.0
    %333 = vmatprep.mubr.f32.mxu0 0.0
    %334 = vmatmul.mubr.f32.gmra.mrb[0].mxu0 %v267
    %v335 = vpop.f32.mrb[0].mxu0
    %v336 = vadd.f32 %v144, %v335
    %v337 = vpop.f32.mrb[0].mxu0
    %338 = vdwg.mxu0
    %v339 = vmul.f32 %v336, 0.5
    %v340 = vtanh.pop %v339
    %v341 = vmul.f32 %v340, 0.5
    %v342 = vadd.f32 %v341, 0.5
    %344 = vrot.lane.b32.xlu0 %v336, 32
    %v345 = vpop.permute.xlu0 %344
    %v347 = vmul.f32 %v342, %v345
    %349 = vrot.lane.b32.xlu0 %v347, 64
    %v350 = vpop.permute.xlu0 %349
    %v352 = vadd.f32 %v336, %v350
    %v353 = vtanh.pop %v352
    %v354 = vsub.f32 %v263, %v353
    %356 = vrot.lane.b32.xlu0 %v354, 96
    %v357 = vpop.permute.xlu0 %356
    %v359 = vmul.f32 %v342, %v357
    %361 = vrot.lane.b32.xlu0 %v359, 32
    %v362 = vpop.permute.xlu0 %361
    %v364 = vadd.f32 %v353, %v362
    %366 = vrot.lane.b32.xlu0 %v364, 64
    %v367 = vpop.permute.xlu0 %366
    %v368 = vsel %vm165, %v367, 0
    %370 = vmatprep.subr.mxu0 0.0
    %371 = vmatpush1.msra.mxu0 %v49
    %372 = vmatprep.subr.mxu0 0.0
    %373 = vmatpush1.msra.mxu0 %v50
    %374 = vmatprep.subr.mxu0 0.0
    %375 = vmatpush1.msra.mxu0 %v51
    %376 = vmatprep.subr.mxu0 0.0
    %377 = vmatpush1.msra.mxu0 %v52
    %378 = vmatprep.subr.mxu0 0.0
    %379 = vmatpush1.msra.mxu0 0.0
    %380 = vmatprep.subr.mxu0 0.0
    %381 = vmatpush1.msra.mxu0 0.0
    %382 = vmatprep.subr.mxu0 0.0
    %383 = vmatpush1.msra.mxu0 0.0
    %384 = vmatprep.subr.mxu0 0.0
    %385 = vmatpush1.msra.mxu0 0.0
    %386 = vmatprep.subr.mxu0 0.0
    %387 = vmatpush1.msra.mxu0 0.0
    %388 = vmatprep.subr.mxu0 0.0
    %389 = vmatpush1.msra.mxu0 0.0
    %390 = vmatprep.subr.mxu0 0.0
    %391 = vmatpush1.msra.mxu0 0.0
    %392 = vmatprep.subr.mxu0 0.0
    %393 = vmatpush1.msra.mxu0 0.0
    %394 = vmatprep.subr.mxu0 0.0
    %395 = vmatpush1.msra.mxu0 0.0
    %396 = vmatprep.subr.mxu0 0.0
    %397 = vmatpush1.msra.mxu0 0.0
    %398 = vmatprep.subr.mxu0 0.0
    %399 = vmatpush1.msra.mxu0 0.0
    %400 = vmatprep.subr.mxu0 0.0
    %401 = vmatpush1.msra.mxu0 0.0
    %402 = vmatprep.subr.mxu0 0.0
    %403 = vmatpush1.msra.mxu0 0.0
    %404 = vmatprep.subr.mxu0 0.0
    %405 = vmatpush1.msra.mxu0 0.0
    %406 = vmatprep.subr.mxu0 0.0
    %407 = vmatpush1.msra.mxu0 0.0
    %408 = vmatprep.subr.mxu0 0.0
    %409 = vmatpush1.msra.mxu0 0.0
    %410 = vmatprep.subr.mxu0 0.0
    %411 = vmatpush1.msra.mxu0 0.0
    %412 = vmatprep.subr.mxu0 0.0
    %413 = vmatpush1.msra.mxu0 0.0
    %414 = vmatprep.subr.mxu0 0.0
    %415 = vmatpush1.msra.mxu0 0.0
    %416 = vmatprep.subr.mxu0 0.0
    %417 = vmatpush1.msra.mxu0 0.0
    %418 = vmatprep.subr.mxu0 0.0
    %419 = vmatpush1.msra.mxu0 0.0
    %420 = vmatprep.subr.mxu0 0.0
    %421 = vmatpush1.msra.mxu0 0.0
    %422 = vmatprep.subr.mxu0 0.0
    %423 = vmatpush1.msra.mxu0 0.0
    %424 = vmatprep.subr.mxu0 0.0
    %425 = vmatpush1.msra.mxu0 0.0
    %426 = vmatprep.subr.mxu0 0.0
    %427 = vmatpush1.msra.mxu0 0.0
    %428 = vmatprep.subr.mxu0 0.0
    %429 = vmatpush1.msra.mxu0 0.0
    %430 = vmatprep.subr.mxu0 0.0
    %431 = vmatpush1.msra.mxu0 0.0
    %432 = vmatprep.subr.mxu0 0.0
    %433 = vmatpush1.msra.mxu0 0.0
    %434 = vmatprep.mubr.f32.mxu0 0.0
    %435 = vmatmul.mubr.f32.gmra.mrb[0].mxu0 %v368
    %v436 = vpop.f32.mrb[0].mxu0
    %v437 = vadd.f32 %v144, %v436
    %v438 = vpop.f32.mrb[0].mxu0
    %439 = vdwg.mxu0
    %v440 = vmul.f32 %v437, 0.5
    %v441 = vtanh.pop %v440
    %v442 = vmul.f32 %v441, 0.5
    %v443 = vadd.f32 %v442, 0.5
    %445 = vrot.lane.b32.xlu0 %v437, 32
    %v446 = vpop.permute.xlu0 %445
    %v448 = vmul.f32 %v443, %v446
    %450 = vrot.lane.b32.xlu0 %v448, 64
    %v451 = vpop.permute.xlu0 %450
    %v453 = vadd.f32 %v437, %v451
    %v454 = vtanh.pop %v453
    %v455 = vsub.f32 %v364, %v454
    %457 = vrot.lane.b32.xlu0 %v455, 96
    %v458 = vpop.permute.xlu0 %457
    %v460 = vmul.f32 %v443, %v458
    %462 = vrot.lane.b32.xlu0 %v460, 32
    %v463 = vpop.permute.xlu0 %462
    %v465 = vadd.f32 %v454, %v463
    %467 = vrot.lane.b32.xlu0 %v263, 96
    %v468 = vpop.permute.xlu0 %467
    %471 = vrot.lane.b32.xlu0 %v465, 32
    %v472 = vpop.permute.xlu0 %471
    %v474 = vsel %vm165, %v164, %v468
    %vm475 = vcmask 523264
    %v476 = vsel %vm475, %v474, %v364
    %vm477 = vcmask 785408
    %v478 = vsel %vm477, %v476, %v472
    %479 = vst [vmem:[#allocation7] sm:$0xff] %v478
    %480 = vrot.lane.b32.xlu0 %v465, 64
    %v481 = vpop.permute.xlu0 %480
    %v482 = vsel %vm165, %v481, 0
    %484 = vmatprep.subr.mxu0 0.0
    %485 = vmatpush1.msra.mxu0 %v49
    %486 = vmatprep.subr.mxu0 0.0
    %487 = vmatpush1.msra.mxu0 %v50
    %488 = vmatprep.subr.mxu0 0.0
    %489 = vmatpush1.msra.mxu0 %v51
    %490 = vmatprep.subr.mxu0 0.0
    %491 = vmatpush1.msra.mxu0 %v52
    %492 = vmatprep.subr.mxu0 0.0
    %493 = vmatpush1.msra.mxu0 0.0
    %494 = vmatprep.subr.mxu0 0.0
    %495 = vmatpush1.msra.mxu0 0.0
    %496 = vmatprep.subr.mxu0 0.0
    %497 = vmatpush1.msra.mxu0 0.0
    %498 = vmatprep.subr.mxu0 0.0
    %499 = vmatpush1.msra.mxu0 0.0
    %500 = vmatprep.subr.mxu0 0.0
    %501 = vmatpush1.msra.mxu0 0.0
    %502 = vmatprep.subr.mxu0 0.0
    %503 = vmatpush1.msra.mxu0 0.0
    %504 = vmatprep.subr.mxu0 0.0
    %505 = vmatpush1.msra.mxu0 0.0
    %506 = vmatprep.subr.mxu0 0.0
    %507 = vmatpush1.msra.mxu0 0.0
    %508 = vmatprep.subr.mxu0 0.0
    %509 = vmatpush1.msra.mxu0 0.0
    %510 = vmatprep.subr.mxu0 0.0
    %511 = vmatpush1.msra.mxu0 0.0
    %512 = vmatprep.subr.mxu0 0.0
    %513 = vmatpush1.msra.mxu0 0.0
    %514 = vmatprep.subr.mxu0 0.0
    %515 = vmatpush1.msra.mxu0 0.0
    %516 = vmatprep.subr.mxu0 0.0
    %517 = vmatpush1.msra.mxu0 0.0
    %518 = vmatprep.subr.mxu0 0.0
    %519 = vmatpush1.msra.mxu0 0.0
    %520 = vmatprep.subr.mxu0 0.0
    %521 = vmatpush1.msra.mxu0 0.0
    %522 = vmatprep.subr.mxu0 0.0
    %523 = vmatpush1.msra.mxu0 0.0
    %524 = vmatprep.subr.mxu0 0.0
    %525 = vmatpush1.msra.mxu0 0.0
    %526 = vmatprep.subr.mxu0 0.0
    %527 = vmatpush1.msra.mxu0 0.0
    %528 = vmatprep.subr.mxu0 0.0
    %529 = vmatpush1.msra.mxu0 0.0
    %530 = vmatprep.subr.mxu0 0.0
    %531 = vmatpush1.msra.mxu0 0.0
    %532 = vmatprep.subr.mxu0 0.0
    %533 = vmatpush1.msra.mxu0 0.0
    %534 = vmatprep.subr.mxu0 0.0
    %535 = vmatpush1.msra.mxu0 0.0
    %536 = vmatprep.subr.mxu0 0.0
    %537 = vmatpush1.msra.mxu0 0.0
    %538 = vmatprep.subr.mxu0 0.0
    %539 = vmatpush1.msra.mxu0 0.0
    %540 = vmatprep.subr.mxu0 0.0
    %541 = vmatpush1.msra.mxu0 0.0
    %542 = vmatprep.subr.mxu0 0.0
    %543 = vmatpush1.msra.mxu0 0.0
    %544 = vmatprep.subr.mxu0 0.0
    %545 = vmatpush1.msra.mxu0 0.0
    %546 = vmatprep.subr.mxu0 0.0
    %547 = vmatpush1.msra.mxu0 0.0
    %548 = vmatprep.mubr.f32.mxu0 0.0
    %549 = vmatmul.mubr.f32.gmra.mrb[0].mxu0 %v482
    %v550 = vpop.f32.mrb[0].mxu0
    %v551 = vadd.f32 %v144, %v550
    %v552 = vpop.f32.mrb[0].mxu0
    %553 = vdwg.mxu0
    %v554 = vmul.f32 %v551, 0.5
    %v555 = vtanh.pop %v554
    %v556 = vmul.f32 %v555, 0.5
    %v557 = vadd.f32 %v556, 0.5
    %559 = vrot.lane.b32.xlu0 %v551, 32
    %v560 = vpop.permute.xlu0 %559
    %v562 = vmul.f32 %v557, %v560
    %564 = vrot.lane.b32.xlu0 %v562, 64
    %v565 = vpop.permute.xlu0 %564
    %v567 = vadd.f32 %v551, %v565
    %v568 = vtanh.pop %v567
    %v569 = vsub.f32 %v465, %v568
    %571 = vrot.lane.b32.xlu0 %v569, 96
    %v572 = vpop.permute.xlu0 %571
    %v574 = vmul.f32 %v557, %v572
    %576 = vrot.lane.b32.xlu0 %v574, 32
    %v577 = vpop.permute.xlu0 %576
    %v579 = vadd.f32 %v568, %v577
    %581 = vrot.lane.b32.xlu0 %v579, 64
    %v582 = vpop.permute.xlu0 %581
    %v583 = vsel %vm165, %v582, 0
    %585 = vmatprep.subr.mxu0 0.0
    %586 = vmatpush1.msra.mxu0 %v49
    %587 = vmatprep.subr.mxu0 0.0
    %588 = vmatpush1.msra.mxu0 %v50
    %589 = vmatprep.subr.mxu0 0.0
    %590 = vmatpush1.msra.mxu0 %v51
    %591 = vmatprep.subr.mxu0 0.0
    %592 = vmatpush1.msra.mxu0 %v52
    %593 = vmatprep.subr.mxu0 0.0
    %594 = vmatpush1.msra.mxu0 0.0
    %595 = vmatprep.subr.mxu0 0.0
    %596 = vmatpush1.msra.mxu0 0.0
    %597 = vmatprep.subr.mxu0 0.0
    %598 = vmatpush1.msra.mxu0 0.0
    %599 = vmatprep.subr.mxu0 0.0
    %600 = vmatpush1.msra.mxu0 0.0
    %601 = vmatprep.subr.mxu0 0.0
    %602 = vmatpush1.msra.mxu0 0.0
    %603 = vmatprep.subr.mxu0 0.0
    %604 = vmatpush1.msra.mxu0 0.0
    %605 = vmatprep.subr.mxu0 0.0
    %606 = vmatpush1.msra.mxu0 0.0
    %607 = vmatprep.subr.mxu0 0.0
    %608 = vmatpush1.msra.mxu0 0.0
    %609 = vmatprep.subr.mxu0 0.0
    %610 = vmatpush1.msra.mxu0 0.0
    %611 = vmatprep.subr.mxu0 0.0
    %612 = vmatpush1.msra.mxu0 0.0
    %613 = vmatprep.subr.mxu0 0.0
    %614 = vmatpush1.msra.mxu0 0.0
    %615 = vmatprep.subr.mxu0 0.0
    %616 = vmatpush1.msra.mxu0 0.0
    %617 = vmatprep.subr.mxu0 0.0
    %618 = vmatpush1.msra.mxu0 0.0
    %619 = vmatprep.subr.mxu0 0.0
    %620 = vmatpush1.msra.mxu0 0.0
    %621 = vmatprep.subr.mxu0 0.0
    %622 = vmatpush1.msra.mxu0 0.0
    %623 = vmatprep.subr.mxu0 0.0
    %624 = vmatpush1.msra.mxu0 0.0
    %625 = vmatprep.subr.mxu0 0.0
    %626 = vmatpush1.msra.mxu0 0.0
    %627 = vmatprep.subr.mxu0 0.0
    %628 = vmatpush1.msra.mxu0 0.0
    %629 = vmatprep.subr.mxu0 0.0
    %630 = vmatpush1.msra.mxu0 0.0
    %631 = vmatprep.subr.mxu0 0.0
    %632 = vmatpush1.msra.mxu0 0.0
    %633 = vmatprep.subr.mxu0 0.0
    %634 = vmatpush1.msra.mxu0 0.0
    %635 = vmatprep.subr.mxu0 0.0
    %636 = vmatpush1.msra.mxu0 0.0
    %637 = vmatprep.subr.mxu0 0.0
    %638 = vmatpush1.msra.mxu0 0.0
    %639 = vmatprep.subr.mxu0 0.0
    %640 = vmatpush1.msra.mxu0 0.0
    %641 = vmatprep.subr.mxu0 0.0
    %642 = vmatpush1.msra.mxu0 0.0
    %643 = vmatprep.subr.mxu0 0.0
    %644 = vmatpush1.msra.mxu0 0.0
    %645 = vmatprep.subr.mxu0 0.0
    %646 = vmatpush1.msra.mxu0 0.0
    %647 = vmatprep.subr.mxu0 0.0
    %648 = vmatpush1.msra.mxu0 0.0
    %649 = vmatprep.mubr.f32.mxu0 0.0
    %650 = vmatmul.mubr.f32.gmra.mrb[0].mxu0 %v583
    %v651 = vpop.f32.mrb[0].mxu0
    %v652 = vadd.f32 %v144, %v651
    %v653 = vpop.f32.mrb[0].mxu0
    %654 = vdwg.mxu0
    %v655 = vmul.f32 %v652, 0.5
    %v656 = vtanh.pop %v655
    %v657 = vmul.f32 %v656, 0.5
    %v658 = vadd.f32 %v657, 0.5
    %660 = vrot.lane.b32.xlu0 %v652, 32
    %v661 = vpop.permute.xlu0 %660
    %v663 = vmul.f32 %v658, %v661
    %665 = vrot.lane.b32.xlu0 %v663, 64
    %v666 = vpop.permute.xlu0 %665
    %v668 = vadd.f32 %v652, %v666
    %v669 = vtanh.pop %v668
    %v670 = vsub.f32 %v579, %v669
    %672 = vrot.lane.b32.xlu0 %v670, 96
    %v673 = vpop.permute.xlu0 %672
    %v675 = vmul.f32 %v658, %v673
    %677 = vrot.lane.b32.xlu0 %v675, 32
    %v678 = vpop.permute.xlu0 %677
    %v680 = vadd.f32 %v669, %v678
    %683 = vrot.lane.b32.xlu0 %v680, 96
    %v684 = vpop.permute.xlu0 %683
    %v686 = vsel %vm165, %v582, %v684
    %687 = vst.msk [vmem:[#allocation7 + $0x8] sm:$0xff] %vm475, %v686
    // Predicated region
    $region22: #{tpu_custom_call.1} parent=1 // pred_check
      _
    $region23: #{tpu_custom_call.1} parent=1 // pred_check_branch
      %689 = sbr.rel (0) target = $region25
    $region24: #{tpu_custom_call.1} parent=1 // pred_region
      %s691 = ssub.s32 256, 256
      %692 = vsyncadd [#allocation4], %s691
      %s694 = sshll.u32 [#allocation7], 4
      %s695 = int_to_ptr.vmem [resolvable:$true] %s694
      %697 = dma.vmem_to_hbm [thread:$0]  %s695, 256, %s3, [#allocation4]
    $region25: #{tpu_custom_call.1} parent=1 // pred_fallthru
      _
    // Predicated region
    $region26: #{tpu_custom_call.1} parent=1 // pred_check
      _
    $region27: #{tpu_custom_call.1} parent=1 // pred_check_branch
      %699 = sbr.rel (0) target = $region29
    $region28: #{tpu_custom_call.1} parent=1 // pred_region
      %700 = dma.done [#allocation4], 256
    $region29: #{tpu_custom_call.1} parent=1 // pred_fallthru
      _
    %701 = vsyncpa [#allocation3], 1
    %702 = vsyncpa [#allocation6], 1
    %703 = vsyncpa [#allocation4], 1

</llo_original>
